<compile_context>
chip_gen: v6e
topology: v6e:2x2x1
jax: 0.10.0
libtpu: 0.0.40
codegen_flags: <defaults>
</compile_context>

<pallas_src>
import jax
import jax.numpy as jnp
from jax.experimental import pallas as pl
from jax.experimental.pallas import tpu as pltpu


def generator_kernel(x_ref, w1_ref, b1_ref, w2_ref, b2_ref, o_ref):
    # ---- Linear(z_dim, 256) ----  (bf16 weights, f32 accumulate)
    x = x_ref[...]
    w1 = w1_ref[...].astype(jnp.float32)
    h = jnp.dot(x, w1, preferred_element_type=jnp.float32) + b1_ref[...]
    # ---- LeakyReLU(0.01) ----
    h = jnp.where(h > 0, h, 0.01 * h)
    # ---- Linear(256, img_dim_padded) ----
    w2 = w2_ref[...].astype(jnp.float32)
    y = jnp.dot(h, w2, preferred_element_type=jnp.float32) + b2_ref[...]
    # ---- Tanh ----
    o_ref[...] = jnp.tanh(y).astype(o_ref.dtype)


def generator_forward(x, w1, b1, w2, b2):
    """x: (B, z_dim); w1: (z_dim, H); b1: (1, H); w2: (H, img_dim); b2: (1, img_dim)."""
    B, z_dim = x.shape
    hidden = w1.shape[1]
    img_dim = w2.shape[1]

    # Pad output feature dim to a multiple of 128 for lane-dense stores.
    n_pad = ((img_dim + 127) // 128) * 128
    if n_pad != img_dim:
        w2 = jnp.pad(w2, ((0, 0), (0, n_pad - img_dim)))
        b2 = jnp.pad(b2, ((0, 0), (0, n_pad - img_dim)))

    # Batch tile: 256 rows (fills v6e/v7x MXU) when batch is large, 128 for
    # mid sizes, otherwise pad the toy batch up to a multiple of 8 sublanes.
    if B >= 256:
        tm = 256
    elif B >= 128:
        tm = 128
    else:
        tm = ((B + 7) // 8) * 8
    b_pad = ((B + tm - 1) // tm) * tm
    if b_pad != B:
        x = jnp.pad(x, ((0, b_pad - B), (0, 0)))

    # bf16 weights: halve HBM traffic; kernel upcasts and accumulates in f32.
    w1 = w1.astype(jnp.bfloat16)
    w2 = w2.astype(jnp.bfloat16)

    grid = (b_pad // tm,)
    flops = 2 * b_pad * (z_dim * hidden + hidden * n_pad)
    bytes_accessed = (x.size * 4 + w1.size * 2 + b1.size * 4
                      + w2.size * 2 + b2.size * 4 + b_pad * n_pad * 4)

    out = pl.pallas_call(
        generator_kernel,
        out_shape=jax.ShapeDtypeStruct((b_pad, n_pad), jnp.float32),
        grid=grid,
        in_specs=[
            pl.BlockSpec((tm, z_dim), lambda i: (i, 0)),      # x: tiled over batch
            pl.BlockSpec((z_dim, hidden), lambda i: (0, 0)),  # w1: resident
            pl.BlockSpec((1, hidden), lambda i: (0, 0)),      # b1: resident
            pl.BlockSpec((hidden, n_pad), lambda i: (0, 0)),  # w2: resident
            pl.BlockSpec((1, n_pad), lambda i: (0, 0)),       # b2: resident
        ],
        out_specs=pl.BlockSpec((tm, n_pad), lambda i: (i, 0)),
        compiler_params=pltpu.CompilerParams(
            dimension_semantics=("parallel",)),
        cost_estimate=pl.CostEstimate(
            flops=flops,
            transcendentals=b_pad * n_pad,
            bytes_accessed=bytes_accessed),
    )(x, w1, b1, w2, b2)

    return out[:B, :img_dim]


def init_params(key, z_dim, hidden, img_dim):
    """Deterministic init mimicking PyTorch nn.Linear default (uniform +/- 1/sqrt(fan_in))."""
    k1, k2, k3, k4 = jax.random.split(key, 4)
    bound1 = 1.0 / jnp.sqrt(z_dim)
    bound2 = 1.0 / jnp.sqrt(hidden)
    w1 = jax.random.uniform(k1, (z_dim, hidden), jnp.float32, -bound1, bound1)
    b1 = jax.random.uniform(k2, (1, hidden), jnp.float32, -bound1, bound1)
    w2 = jax.random.uniform(k3, (hidden, img_dim), jnp.float32, -bound2, bound2)
    b2 = jax.random.uniform(k4, (1, img_dim), jnp.float32, -bound2, bound2)
    return w1, b1, w2, b2


if __name__ == "__main__":
    z_dim = 64          # as in the reference script
    hidden = 256        # fixed by the module
    img_dim = 784       # e.g. 28*28 MNIST image flattened
    batch = 8

    key = jax.random.PRNGKey(0)
    kx, kp = jax.random.split(key)
    x = jax.random.normal(kx, (batch, z_dim), jnp.float32)
    w1, b1, w2, b2 = init_params(kp, z_dim, hidden, img_dim)

    out = generator_forward(x, w1, b1, w2, b2)
    jax.block_until_ready(out)

    # Pure-JAX reference check using the same bf16-rounded weights the kernel sees.
    w1r = w1.astype(jnp.bfloat16).astype(jnp.float32)
    w2r = w2.astype(jnp.bfloat16).astype(jnp.float32)
    h_ref = jnp.dot(x, w1r, precision=jax.lax.Precision.HIGHEST) + b1
    h_ref = jnp.where(h_ref > 0, h_ref, 0.01 * h_ref)
    y_ref = jnp.tanh(jnp.dot(h_ref, w2r, precision=jax.lax.Precision.HIGHEST) + b2)

    assert out.shape == (batch, img_dim)
    assert jnp.allclose(out, y_ref, atol=1e-3, rtol=1e-3)

    print("KERNEL_OK")
</pallas_src>

<mosaic_0001>
module attributes {stable_mosaic.version = 11 : i64} {
  func.func @generator_kernel(%arg0: i32, %arg1: memref<8x64xf32, #tpu.memory_space<vmem>>, %arg2: memref<64x256xbf16, #tpu.memory_space<vmem>>, %arg3: memref<1x256xf32, #tpu.memory_space<vmem>>, %arg4: memref<256x896xbf16, #tpu.memory_space<vmem>>, %arg5: memref<1x896xf32, #tpu.memory_space<vmem>>, %arg6: memref<8x896xf32, #tpu.memory_space<vmem>>) attributes {dimension_semantics = [#tpu.dimension_semantics<parallel>], iteration_bounds = array<i64: 1>, scalar_prefetch = 0 : i64, scratch_operands = 0 : i64, tpu.core_type = #tpu.core_type<tc>, window_params = [{transform_indices = @transform_0, window_bounds = array<i64: 8, 64>}, {pipeline_mode = #tpu.pipeline_mode<synchronous>, transform_indices = @transform_1, window_bounds = array<i64: 64, 256>}, {pipeline_mode = #tpu.pipeline_mode<synchronous>, transform_indices = @transform_2, window_bounds = array<i64: 1, 256>}, {pipeline_mode = #tpu.pipeline_mode<synchronous>, transform_indices = @transform_3, window_bounds = array<i64: 256, 896>}, {pipeline_mode = #tpu.pipeline_mode<synchronous>, transform_indices = @transform_4, window_bounds = array<i64: 1, 896>}, {transform_indices = @transform_5, window_bounds = array<i64: 8, 896>}]} {
    %c0 = arith.constant 0 : index
    %c0_0 = arith.constant 0 : index
    %0 = vector.load %arg1[%c0, %c0_0] : memref<8x64xf32, #tpu.memory_space<vmem>>, vector<8x64xf32>
    %c0_1 = arith.constant 0 : index
    %c0_2 = arith.constant 0 : index
    %1 = vector.load %arg2[%c0_1, %c0_2] : memref<64x256xbf16, #tpu.memory_space<vmem>>, vector<64x256xbf16>
    %2 = arith.extf %1 : vector<64x256xbf16> to vector<64x256xf32>
    %cst = arith.constant dense<0.000000e+00> : vector<8x256xf32>
    %3 = tpu.matmul %0, %2, %cst {dimension_numbers = #tpu.dot_dimension_numbers<[1], [0], [0], [1], [0, 0, 1, 1], [], []>} : vector<8x64xf32>, vector<64x256xf32>, vector<8x256xf32> -> vector<8x256xf32>
    %c0_3 = arith.constant 0 : index
    %c0_4 = arith.constant 0 : index
    %4 = vector.load %arg3[%c0_3, %c0_4] : memref<1x256xf32, #tpu.memory_space<vmem>>, vector<1x256xf32>
    %5 = vector.broadcast %4 : vector<1x256xf32> to vector<8x256xf32>
    %6 = arith.addf %3, %5 : vector<8x256xf32>
    %cst_5 = arith.constant 0.000000e+00 : f32
    %7 = vector.broadcast %cst_5 : f32 to vector<8x256xf32>
    %8 = arith.cmpf ogt, %6, %7 : vector<8x256xf32>
    %cst_6 = arith.constant 0.00999999977 : f32
    %9 = vector.broadcast %cst_6 : f32 to vector<8x256xf32>
    %10 = arith.mulf %9, %6 : vector<8x256xf32>
    %11 = arith.select %8, %6, %10 : vector<8x256xi1>, vector<8x256xf32>
    %c0_7 = arith.constant 0 : index
    %c0_8 = arith.constant 0 : index
    %12 = vector.load %arg4[%c0_7, %c0_8] : memref<256x896xbf16, #tpu.memory_space<vmem>>, vector<256x896xbf16>
    %13 = arith.extf %12 : vector<256x896xbf16> to vector<256x896xf32>
    %cst_9 = arith.constant dense<0.000000e+00> : vector<8x896xf32>
    %14 = tpu.matmul %11, %13, %cst_9 {dimension_numbers = #tpu.dot_dimension_numbers<[1], [0], [0], [1], [0, 0, 1, 1], [], []>} : vector<8x256xf32>, vector<256x896xf32>, vector<8x896xf32> -> vector<8x896xf32>
    %c0_10 = arith.constant 0 : index
    %c0_11 = arith.constant 0 : index
    %15 = vector.load %arg5[%c0_10, %c0_11] : memref<1x896xf32, #tpu.memory_space<vmem>>, vector<1x896xf32>
    %16 = vector.broadcast %15 : vector<1x896xf32> to vector<8x896xf32>
    %17 = arith.addf %14, %16 : vector<8x896xf32>
    %18 = math.tanh %17 : vector<8x896xf32>
    %c0_12 = arith.constant 0 : index
    %c0_13 = arith.constant 0 : index
    %19 = vector.load %arg6[%c0_12, %c0_13] : memref<8x896xf32, #tpu.memory_space<vmem>>, vector<8x896xf32>
    tpu.vector_store %arg6[%c0_12, %c0_13], %18 {strides = array<i32>} : memref<8x896xf32, #tpu.memory_space<vmem>>, vector<8x896xf32>,
    return
  }
  func.func @transform_0(%arg0: i32) -> (i32, i32) {
    %c0_i32 = arith.constant 0 : i32
    %c0_i32_0 = arith.constant 0 : i32
    return %arg0, %c0_i32 : i32, i32
  }
  func.func @transform_1(%arg0: i32) -> (i32, i32) {
    %c0_i32 = arith.constant 0 : i32
    %c0_i32_0 = arith.constant 0 : i32
    %c0_i32_1 = arith.constant 0 : i32
    return %c0_i32, %c0_i32_0 : i32, i32
  }
  func.func @transform_2(%arg0: i32) -> (i32, i32) {
    %c0_i32 = arith.constant 0 : i32
    %c0_i32_0 = arith.constant 0 : i32
    %c0_i32_1 = arith.constant 0 : i32
    return %c0_i32, %c0_i32_0 : i32, i32
  }
  func.func @transform_3(%arg0: i32) -> (i32, i32) {
    %c0_i32 = arith.constant 0 : i32
    %c0_i32_0 = arith.constant 0 : i32
    %c0_i32_1 = arith.constant 0 : i32
    return %c0_i32, %c0_i32_0 : i32, i32
  }
  func.func @transform_4(%arg0: i32) -> (i32, i32) {
    %c0_i32 = arith.constant 0 : i32
    %c0_i32_0 = arith.constant 0 : i32
    %c0_i32_1 = arith.constant 0 : i32
    return %c0_i32, %c0_i32_0 : i32, i32
  }
  func.func @transform_5(%arg0: i32) -> (i32, i32) {
    %c0_i32 = arith.constant 0 : i32
    %c0_i32_0 = arith.constant 0 : i32
    return %arg0, %c0_i32 : i32, i32
  }
}

</mosaic_0001>

<llo_original>
// kernel: tpu_custom_call.1
$region0: #{tpu_custom_call.1}
  #allocation0 [shape = 'u32[]', space=smem, size = 0x4, offset = 0x4, fixed_abs, tag = 'smem constant byte address 0x4 - core index']
  #allocation1 [shape = 'u32[144,128]{1,0:T(1,128)}', space=vmem, size = 0x12000, scoped, tag = 'internal scratch']
  %s0 = inlined_call_operand.hbm [shape: f32[8,64], index: 0, kind: input, shape index: {}]
  %s1 = inlined_call_operand.hbm [shape: bf16[64,256], index: 1, kind: input, shape index: {}]
  %s2 = inlined_call_operand.hbm [shape: f32[1,256], index: 2, kind: input, shape index: {}]
  %s3 = inlined_call_operand.hbm [shape: bf16[256,896], index: 3, kind: input, shape index: {}]
  %s4 = inlined_call_operand.vmem [shape: f32[1,896], index: 4, kind: input, shape index: {}]
  %s5 = inlined_call_operand.hbm [shape: f32[8,896], index: 5, kind: output, shape index: {}]
  %s6 = sld [smem:[#allocation0]]
  $region46: #{tpu_custom_call.1} parent=0
    _
  %s8 = ssub.s32 1, %s6
  %s9 = scalar_select 0, %s8, %s6
  $region1: #{tpu_custom_call.1} parent=0
    #allocation2 [shape = 'u8[4096]{0}', space=vmem, size = 0x1000, scoped, tag = 'input window, operand 0, single buffered']
    #allocation3 [shape = 's32[1]{0}', space=sflag, size = 0x4, scoped, tag = 'scoped memory for tpu_custom_call.1']
    #allocation4 [shape = 's32[1]{0}', space=sflag, size = 0x4, scoped, tag = 'scoped memory for tpu_custom_call.1']
    #allocation5 [shape = 'u8[32768]{0}', space=vmem, size = 0x8000, scoped, tag = 'input window, operand 1, single buffered']
    #allocation6 [shape = 's32[1]{0}', space=sflag, size = 0x4, scoped, tag = 'scoped memory for tpu_custom_call.1']
    #allocation7 [shape = 'u8[1024]{0}', space=vmem, size = 0x400, scoped, tag = 'input window, operand 2, single buffered']
    #allocation8 [shape = 'u8[458752]{0}', space=vmem, size = 0x70000, scoped, tag = 'input window, operand 3, single buffered']
    #allocation9 [shape = 's32[1]{0}', space=sflag, size = 0x4, scoped, tag = 'scoped memory for tpu_custom_call.1']
    #allocation10 [shape = 'u8[28672]{0}', space=vmem, size = 0x7000, scoped, tag = 'output window, operand 0, single buffered']
    %10 = vsyncpa [#allocation3], 0
    %11 = vsyncpa [#allocation6], 0
    %12 = vsyncpa [#allocation9], 0
    %13 = vsyncpa [#allocation4], 0
    // Predicated region
    $region2: #{tpu_custom_call.1} parent=1 // pred_check
      _
    $region3: #{tpu_custom_call.1} parent=1 // pred_check_branch
      %15 = sbr.rel (0) target = $region5
    $region4: #{tpu_custom_call.1} parent=1 // pred_region
      %s17 = ssub.s32 128, 128
      %18 = vsyncadd [#allocation3], %s17
      %s20 = sshll.u32 [#allocation2], 4
      %s21 = int_to_ptr.vmem [resolvable:$true] %s20
      %23 = dma.hbm_to_vmem [thread:$0]  %s0, 128, %s21, [#allocation3]
    $region5: #{tpu_custom_call.1} parent=1 // pred_fallthru
      _
    // Predicated region
    $region6: #{tpu_custom_call.1} parent=1 // pred_check
      _
    $region7: #{tpu_custom_call.1} parent=1 // pred_check_branch
      %25 = sbr.rel (0) target = $region9
    $region8: #{tpu_custom_call.1} parent=1 // pred_region
      %s27 = ssub.s32 1024, 1024
      %28 = vsyncadd [#allocation6], %s27
      %s29 = sshll.u32 [#allocation5], 4
      %s30 = int_to_ptr.vmem [resolvable:$true] %s29
      %35 = dma.hbm_to_vmem [thread:$0]  %s1, 1024, %s30, [#allocation6], 128, 128, 8
    $region9: #{tpu_custom_call.1} parent=1 // pred_fallthru
      _
    // Predicated region
    $region10: #{tpu_custom_call.1} parent=1 // pred_check
      _
    $region11: #{tpu_custom_call.1} parent=1 // pred_check_branch
      %37 = sbr.rel (0) target = $region13
    $region12: #{tpu_custom_call.1} parent=1 // pred_region
      %s39 = ssub.s32 32, 32
      %40 = vsyncadd [#allocation6], %s39
      %s42 = sshll.u32 [#allocation7], 4
      %s43 = int_to_ptr.vmem [resolvable:$true] %s42
      %45 = dma.hbm_to_vmem [thread:$0]  %s2, 32, %s43, [#allocation6]
    $region13: #{tpu_custom_call.1} parent=1 // pred_fallthru
      _
    // Predicated region
    $region14: #{tpu_custom_call.1} parent=1 // pred_check
      _
    $region15: #{tpu_custom_call.1} parent=1 // pred_check_branch
      %47 = sbr.rel (0) target = $region17
    $region16: #{tpu_custom_call.1} parent=1 // pred_region
      %s49 = ssub.s32 14336, 14336
      %50 = vsyncadd [#allocation9], %s49
      %s51 = sshll.u32 [#allocation8], 4
      %s52 = int_to_ptr.vmem [resolvable:$true] %s51
      %57 = dma.hbm_to_vmem [thread:$0]  %s3, 14336, %s52, [#allocation9], 448, 448, 28
    $region17: #{tpu_custom_call.1} parent=1 // pred_fallthru
      _
    // Predicated region
    $region18: #{tpu_custom_call.1} parent=1 // pred_check
      _
    $region19: #{tpu_custom_call.1} parent=1 // pred_check_branch
      %59 = sbr.rel (0) target = $region21
    $region20: #{tpu_custom_call.1} parent=1 // pred_region
      _
    $region21: #{tpu_custom_call.1} parent=1 // pred_fallthru
      _
    // Predicated region
    $region22: #{tpu_custom_call.1} parent=1 // pred_check
      _
    $region23: #{tpu_custom_call.1} parent=1 // pred_check_branch
      %61 = sbr.rel (0) target = $region25
    $region24: #{tpu_custom_call.1} parent=1 // pred_region
      %62 = dma.done [#allocation3], 128
    $region25: #{tpu_custom_call.1} parent=1 // pred_fallthru
      _
    // Predicated region
    $region26: #{tpu_custom_call.1} parent=1 // pred_check
      _
    $region27: #{tpu_custom_call.1} parent=1 // pred_check_branch
      %64 = sbr.rel (0) target = $region29
    $region28: #{tpu_custom_call.1} parent=1 // pred_region
      %65 = dma.done [#allocation6], 1024
    $region29: #{tpu_custom_call.1} parent=1 // pred_fallthru
      _
    // Predicated region
    $region30: #{tpu_custom_call.1} parent=1 // pred_check
      _
    $region31: #{tpu_custom_call.1} parent=1 // pred_check_branch
      %67 = sbr.rel (0) target = $region33
    $region32: #{tpu_custom_call.1} parent=1 // pred_region
      %68 = dma.done [#allocation6], 32
    $region33: #{tpu_custom_call.1} parent=1 // pred_fallthru
      _
    // Predicated region
    $region34: #{tpu_custom_call.1} parent=1 // pred_check
      _
    $region35: #{tpu_custom_call.1} parent=1 // pred_check_branch
      %70 = sbr.rel (0) target = $region37
    $region36: #{tpu_custom_call.1} parent=1 // pred_region
      %71 = dma.done [#allocation9], 14336
    $region37: #{tpu_custom_call.1} parent=1 // pred_fallthru
      _
    %v72 = vld [vmem:[#allocation2] sm:$0xff]
    %v73 = vld [vmem:[#allocation5] sm:$0xff]
    %v74 = vld [vmem:[#allocation5 + $0x8] sm:$0xff]
    %v75 = vld [vmem:[#allocation5 + $0x10] sm:$0xff]
    %v76 = vld [vmem:[#allocation5 + $0x18] sm:$0xff]
    %v77 = vld [vmem:[#allocation5 + $0x20] sm:$0xff]
    %v78 = vld [vmem:[#allocation5 + $0x28] sm:$0xff]
    %v79 = vld [vmem:[#allocation5 + $0x30] sm:$0xff]
    %v80 = vld [vmem:[#allocation5 + $0x38] sm:$0xff]
    %v81 = vunpack.c.l.bf16 %v73
    %v82 = vunpack.c.h.bf16 %v73
    %v83 = vunpack.c.l.bf16 %v74
    %v84 = vunpack.c.h.bf16 %v74
    %v85 = vunpack.c.l.bf16 %v75
    %v86 = vunpack.c.h.bf16 %v75
    %v87 = vunpack.c.l.bf16 %v76
    %v88 = vunpack.c.h.bf16 %v76
    %v89 = vunpack.c.l.bf16 %v77
    %v90 = vunpack.c.h.bf16 %v77
    %v91 = vunpack.c.l.bf16 %v78
    %v92 = vunpack.c.h.bf16 %v78
    %v93 = vunpack.c.l.bf16 %v79
    %v94 = vunpack.c.h.bf16 %v79
    %v95 = vunpack.c.l.bf16 %v80
    %v96 = vunpack.c.h.bf16 %v80
    %v97 = vld [vmem:[#allocation7] sm:$0x3]
    %v99 = vlaneseq
    %v100 = vshrl.u32 %v99, 7
    %v101 = vsub.s32 0, %v100
    %v102 = vrot.slane %v97, %v101
    %v103 = vlaneseq
    %v104 = vshrl.u32 %v103, 7
    %v105 = vsub.s32 1, %v104
    %v106 = vrot.slane %v97, %v105
    %vm109 = vcmask 523264
    %v111 = vsel %vm109, %v72, 0
    %113 = vmatprep.subr.mxu0 0.0
    %114 = vmatpush1.msra.mxu0 0.0
    %115 = vmatprep.subr.mxu0 0.0
    %116 = vmatpush1.msra.mxu0 0.0
    %117 = vmatprep.subr.mxu0 0.0
    %118 = vmatpush1.msra.mxu0 0.0
    %119 = vmatprep.subr.mxu0 0.0
    %120 = vmatpush1.msra.mxu0 0.0
    %121 = vmatprep.subr.mxu0 0.0
    %122 = vmatpush1.msra.mxu0 0.0
    %123 = vmatprep.subr.mxu0 0.0
    %124 = vmatpush1.msra.mxu0 0.0
    %125 = vmatprep.subr.mxu0 0.0
    %126 = vmatpush1.msra.mxu0 0.0
    %127 = vmatprep.subr.mxu0 0.0
    %128 = vmatpush1.msra.mxu0 0.0
    %129 = vmatprep.subr.mxu0 %v96
    %130 = vmatpush1.msra.mxu0 %v95
    %131 = vmatprep.subr.mxu0 %v94
    %132 = vmatpush1.msra.mxu0 %v93
    %133 = vmatprep.subr.mxu0 %v92
    %134 = vmatpush1.msra.mxu0 %v91
    %135 = vmatprep.subr.mxu0 %v90
    %136 = vmatpush1.msra.mxu0 %v89
    %137 = vmatprep.subr.mxu0 %v88
    %138 = vmatpush1.msra.mxu0 %v87
    %139 = vmatprep.subr.mxu0 %v86
    %140 = vmatpush1.msra.mxu0 %v85
    %141 = vmatprep.subr.mxu0 %v84
    %142 = vmatpush1.msra.mxu0 %v83
    %143 = vmatprep.subr.mxu0 %v82
    %144 = vmatpush1.msra.mxu0 %v81
    %145 = vmatprep.subr.mxu0 0.0
    %146 = vmatpush2.msra.mxu0 0.0
    %147 = vmatprep.subr.mxu0 0.0
    %148 = vmatpush2.msra.mxu0 0.0
    %149 = vmatprep.subr.mxu0 0.0
    %150 = vmatpush2.msra.mxu0 0.0
    %151 = vmatprep.subr.mxu0 0.0
    %152 = vmatpush2.msra.mxu0 0.0
    %153 = vmatprep.subr.mxu0 0.0
    %154 = vmatpush2.msra.mxu0 0.0
    %155 = vmatprep.subr.mxu0 0.0
    %156 = vmatpush2.msra.mxu0 0.0
    %157 = vmatprep.subr.mxu0 0.0
    %158 = vmatpush2.msra.mxu0 0.0
    %159 = vmatprep.subr.mxu0 0.0
    %160 = vmatpush2.msra.mxu0 0.0
    %161 = vmatprep.subr.mxu0 0.0
    %162 = vmatpush2.msra.mxu0 0.0
    %163 = vmatprep.subr.mxu0 0.0
    %164 = vmatpush2.msra.mxu0 0.0
    %165 = vmatprep.subr.mxu0 0.0
    %166 = vmatpush2.msra.mxu0 0.0
    %167 = vmatprep.subr.mxu0 0.0
    %168 = vmatpush2.msra.mxu0 0.0
    %169 = vmatprep.subr.mxu0 0.0
    %170 = vmatpush2.msra.mxu0 0.0
    %171 = vmatprep.subr.mxu0 0.0
    %172 = vmatpush2.msra.mxu0 0.0
    %173 = vmatprep.subr.mxu0 0.0
    %174 = vmatpush2.msra.mxu0 0.0
    %175 = vmatprep.subr.mxu0 0.0
    %176 = vmatpush2.msra.mxu0 0.0
    %177 = vmatprep.mubr.f32.mxu0 0.0
    %178 = vmatmul.mubr.f32.gmra.mxu0 %v111
    %v179 = vpop.f32.mrf.mxu0
    %v180 = vadd.f32 %v102, %v179
    %v181 = vpop.f32.mrf.mxu0
    %v182 = vadd.f32 %v106, %v181
    %183 = vdwg.mxu0
    %vm184 = vcmp.gt.f32.partialorder %v180, 0.0
    %vm185 = vcmp.gt.f32.partialorder %v182, 0.0
    %v186 = vmul.f32 %v180, 0.01
    %v187 = vmul.f32 %v182, 0.01
    %v188 = vsel %vm184, %v180, %v186
    %v189 = vsel %vm185, %v182, %v187
    %v190 = vld [vmem:[#allocation8] sm:$0xff]
    %v191 = vld [vmem:[#allocation8 + $0x8] sm:$0xff]
    %v192 = vld [vmem:[#allocation8 + $0x10] sm:$0xff]
    %v193 = vld [vmem:[#allocation8 + $0x18] sm:$0xf]
    %v194 = vld [vmem:[#allocation8 + $0x1c] sm:$0xff]
    %v195 = vld [vmem:[#allocation8 + $0x24] sm:$0xff]
    %v196 = vld [vmem:[#allocation8 + $0x2c] sm:$0xff]
    %v197 = vld [vmem:[#allocation8 + $0x34] sm:$0xf]
    %v198 = vld [vmem:[#allocation8 + $0x38] sm:$0xff]
    %v199 = vld [vmem:[#allocation8 + $0x40] sm:$0xff]
    %v200 = vld [vmem:[#allocation8 + $0x48] sm:$0xff]
    %v201 = vld [vmem:[#allocation8 + $0x50] sm:$0xf]
    %v202 = vld [vmem:[#allocation8 + $0x54] sm:$0xff]
    %v203 = vld [vmem:[#allocation8 + $0x5c] sm:$0xff]
    %v204 = vld [vmem:[#allocation8 + $0x64] sm:$0xff]
    %v205 = vld [vmem:[#allocation8 + $0x6c] sm:$0xf]
    %v206 = vld [vmem:[#allocation8 + $0x70] sm:$0xff]
    %v207 = vld [vmem:[#allocation8 + $0x78] sm:$0xff]
    %v208 = vld [vmem:[#allocation8 + $0x80] sm:$0xff]
    %v209 = vld [vmem:[#allocation8 + $0x88] sm:$0xf]
    %v210 = vld [vmem:[#allocation8 + $0x8c] sm:$0xff]
    %v211 = vld [vmem:[#allocation8 + $0x94] sm:$0xff]
    %v212 = vld [vmem:[#allocation8 + $0x9c] sm:$0xff]
    %v213 = vld [vmem:[#allocation8 + $0xa4] sm:$0xf]
    %v214 = vld [vmem:[#allocation8 + $0xa8] sm:$0xff]
    %v215 = vld [vmem:[#allocation8 + $0xb0] sm:$0xff]
    %v216 = vld [vmem:[#allocation8 + $0xb8] sm:$0xff]
    %v217 = vld [vmem:[#allocation8 + $0xc0] sm:$0xf]
    %v218 = vld [vmem:[#allocation8 + $0xc4] sm:$0xff]
    %v219 = vld [vmem:[#allocation8 + $0xcc] sm:$0xff]
    %v220 = vld [vmem:[#allocation8 + $0xd4] sm:$0xff]
    %v221 = vld [vmem:[#allocation8 + $0xdc] sm:$0xf]
    %v222 = vld [vmem:[#allocation8 + $0xe0] sm:$0xff]
    %v223 = vld [vmem:[#allocation8 + $0xe8] sm:$0xff]
    %v224 = vld [vmem:[#allocation8 + $0xf0] sm:$0xff]
    %v225 = vld [vmem:[#allocation8 + $0xf8] sm:$0xf]
    %v226 = vld [vmem:[#allocation8 + $0xfc] sm:$0xff]
    %v227 = vld [vmem:[#allocation8 + $0x104] sm:$0xff]
    %v228 = vld [vmem:[#allocation8 + $0x10c] sm:$0xff]
    %v229 = vld [vmem:[#allocation8 + $0x114] sm:$0xf]
    %v230 = vld [vmem:[#allocation8 + $0x118] sm:$0xff]
    %v231 = vld [vmem:[#allocation8 + $0x120] sm:$0xff]
    %v232 = vld [vmem:[#allocation8 + $0x128] sm:$0xff]
    %v233 = vld [vmem:[#allocation8 + $0x130] sm:$0xf]
    %v234 = vld [vmem:[#allocation8 + $0x134] sm:$0xff]
    %v235 = vld [vmem:[#allocation8 + $0x13c] sm:$0xff]
    %v236 = vld [vmem:[#allocation8 + $0x144] sm:$0xff]
    %v237 = vld [vmem:[#allocation8 + $0x14c] sm:$0xf]
    %v238 = vld [vmem:[#allocation8 + $0x150] sm:$0xff]
    %v239 = vld [vmem:[#allocation8 + $0x158] sm:$0xff]
    %v240 = vld [vmem:[#allocation8 + $0x160] sm:$0xff]
    %v241 = vld [vmem:[#allocation8 + $0x168] sm:$0xf]
    %v242 = vld [vmem:[#allocation8 + $0x16c] sm:$0xff]
    %v243 = vld [vmem:[#allocation8 + $0x174] sm:$0xff]
    %v244 = vld [vmem:[#allocation8 + $0x17c] sm:$0xff]
    %v245 = vld [vmem:[#allocation8 + $0x184] sm:$0xf]
    %v246 = vld [vmem:[#allocation8 + $0x188] sm:$0xff]
    %v247 = vld [vmem:[#allocation8 + $0x190] sm:$0xff]
    %v248 = vld [vmem:[#allocation8 + $0x198] sm:$0xff]
    %v249 = vld [vmem:[#allocation8 + $0x1a0] sm:$0xf]
    %v250 = vld [vmem:[#allocation8 + $0x1a4] sm:$0xff]
    %v251 = vld [vmem:[#allocation8 + $0x1ac] sm:$0xff]
    %v252 = vld [vmem:[#allocation8 + $0x1b4] sm:$0xff]
    %v253 = vld [vmem:[#allocation8 + $0x1bc] sm:$0xf]
    %v254 = vld [vmem:[#allocation8 + $0x1c0] sm:$0xff]
    %v255 = vld [vmem:[#allocation8 + $0x1c8] sm:$0xff]
    %v256 = vld [vmem:[#allocation8 + $0x1d0] sm:$0xff]
    %v257 = vld [vmem:[#allocation8 + $0x1d8] sm:$0xf]
    %v258 = vld [vmem:[#allocation8 + $0x1dc] sm:$0xff]
    %v259 = vld [vmem:[#allocation8 + $0x1e4] sm:$0xff]
    %v260 = vld [vmem:[#allocation8 + $0x1ec] sm:$0xff]
    %v261 = vld [vmem:[#allocation8 + $0x1f4] sm:$0xf]
    %v262 = vld [vmem:[#allocation8 + $0x1f8] sm:$0xff]
    %v263 = vld [vmem:[#allocation8 + $0x200] sm:$0xff]
    %v264 = vld [vmem:[#allocation8 + $0x208] sm:$0xff]
    %v265 = vld [vmem:[#allocation8 + $0x210] sm:$0xf]
    %v266 = vld [vmem:[#allocation8 + $0x214] sm:$0xff]
    %v267 = vld [vmem:[#allocation8 + $0x21c] sm:$0xff]
    %v268 = vld [vmem:[#allocation8 + $0x224] sm:$0xff]
    %v269 = vld [vmem:[#allocation8 + $0x22c] sm:$0xf]
    %v270 = vld [vmem:[#allocation8 + $0x230] sm:$0xff]
    %v271 = vld [vmem:[#allocation8 + $0x238] sm:$0xff]
    %v272 = vld [vmem:[#allocation8 + $0x240] sm:$0xff]
    %v273 = vld [vmem:[#allocation8 + $0x248] sm:$0xf]
    %v274 = vld [vmem:[#allocation8 + $0x24c] sm:$0xff]
    %v275 = vld [vmem:[#allocation8 + $0x254] sm:$0xff]
    %v276 = vld [vmem:[#allocation8 + $0x25c] sm:$0xff]
    %v277 = vld [vmem:[#allocation8 + $0x264] sm:$0xf]
    %v278 = vld [vmem:[#allocation8 + $0x268] sm:$0xff]
    %v279 = vld [vmem:[#allocation8 + $0x270] sm:$0xff]
    %v280 = vld [vmem:[#allocation8 + $0x278] sm:$0xff]
    %v281 = vld [vmem:[#allocation8 + $0x280] sm:$0xf]
    %v282 = vld [vmem:[#allocation8 + $0x284] sm:$0xff]
    %v283 = vld [vmem:[#allocation8 + $0x28c] sm:$0xff]
    %v284 = vld [vmem:[#allocation8 + $0x294] sm:$0xff]
    %v285 = vld [vmem:[#allocation8 + $0x29c] sm:$0xf]
    %v286 = vld [vmem:[#allocation8 + $0x2a0] sm:$0xff]
    %v287 = vld [vmem:[#allocation8 + $0x2a8] sm:$0xff]
    %v288 = vld [vmem:[#allocation8 + $0x2b0] sm:$0xff]
    %v289 = vld [vmem:[#allocation8 + $0x2b8] sm:$0xf]
    %v290 = vld [vmem:[#allocation8 + $0x2bc] sm:$0xff]
    %v291 = vld [vmem:[#allocation8 + $0x2c4] sm:$0xff]
    %v292 = vld [vmem:[#allocation8 + $0x2cc] sm:$0xff]
    %v293 = vld [vmem:[#allocation8 + $0x2d4] sm:$0xf]
    %v294 = vld [vmem:[#allocation8 + $0x2d8] sm:$0xff]
    %v295 = vld [vmem:[#allocation8 + $0x2e0] sm:$0xff]
    %v296 = vld [vmem:[#allocation8 + $0x2e8] sm:$0xff]
    %v297 = vld [vmem:[#allocation8 + $0x2f0] sm:$0xf]
    %v298 = vld [vmem:[#allocation8 + $0x2f4] sm:$0xff]
    %v299 = vld [vmem:[#allocation8 + $0x2fc] sm:$0xff]
    %v300 = vld [vmem:[#allocation8 + $0x304] sm:$0xff]
    %v301 = vld [vmem:[#allocation8 + $0x30c] sm:$0xf]
    %v302 = vld [vmem:[#allocation8 + $0x310] sm:$0xff]
    %v303 = vld [vmem:[#allocation8 + $0x318] sm:$0xff]
    %v304 = vld [vmem:[#allocation8 + $0x320] sm:$0xff]
    %v305 = vld [vmem:[#allocation8 + $0x328] sm:$0xf]
    %v306 = vld [vmem:[#allocation8 + $0x32c] sm:$0xff]
    %v307 = vld [vmem:[#allocation8 + $0x334] sm:$0xff]
    %v308 = vld [vmem:[#allocation8 + $0x33c] sm:$0xff]
    %v309 = vld [vmem:[#allocation8 + $0x344] sm:$0xf]
    %v310 = vld [vmem:[#allocation8 + $0x348] sm:$0xff]
    %v311 = vld [vmem:[#allocation8 + $0x350] sm:$0xff]
    %v312 = vld [vmem:[#allocation8 + $0x358] sm:$0xff]
    %v313 = vld [vmem:[#allocation8 + $0x360] sm:$0xf]
    %v314 = vld [vmem:[#allocation8 + $0x364] sm:$0xff]
    %v315 = vld [vmem:[#allocation8 + $0x36c] sm:$0xff]
    %v316 = vld [vmem:[#allocation8 + $0x374] sm:$0xff]
    %v317 = vld [vmem:[#allocation8 + $0x37c] sm:$0xf]
    %v318 = vunpack.c.l.bf16 %v190
    %v319 = vunpack.c.h.bf16 %v190
    %v320 = vunpack.c.l.bf16 %v191
    %v321 = vunpack.c.h.bf16 %v191
    %v322 = vunpack.c.l.bf16 %v192
    %v323 = vunpack.c.h.bf16 %v192
    %v324 = vunpack.c.l.bf16 %v193
    %v325 = vunpack.c.l.bf16 %v194
    %v326 = vunpack.c.h.bf16 %v194
    %v327 = vunpack.c.l.bf16 %v195
    %v328 = vunpack.c.h.bf16 %v195
    %v329 = vunpack.c.l.bf16 %v196
    %v330 = vunpack.c.h.bf16 %v196
    %v331 = vunpack.c.l.bf16 %v197
    %v332 = vunpack.c.l.bf16 %v198
    %v333 = vunpack.c.h.bf16 %v198
    %v334 = vunpack.c.l.bf16 %v199
    %v335 = vunpack.c.h.bf16 %v199
    %v336 = vunpack.c.l.bf16 %v200
    %v337 = vunpack.c.h.bf16 %v200
    %v338 = vunpack.c.l.bf16 %v201
    %v339 = vunpack.c.l.bf16 %v202
    %v340 = vunpack.c.h.bf16 %v202
    %v341 = vunpack.c.l.bf16 %v203
    %v342 = vunpack.c.h.bf16 %v203
    %v343 = vunpack.c.l.bf16 %v204
    %v344 = vunpack.c.h.bf16 %v204
    %v345 = vunpack.c.l.bf16 %v205
    %v346 = vunpack.c.l.bf16 %v206
    %v347 = vunpack.c.h.bf16 %v206
    %v348 = vunpack.c.l.bf16 %v207
    %v349 = vunpack.c.h.bf16 %v207
    %v350 = vunpack.c.l.bf16 %v208
    %v351 = vunpack.c.h.bf16 %v208
    %v352 = vunpack.c.l.bf16 %v209
    %v353 = vunpack.c.l.bf16 %v210
    %v354 = vunpack.c.h.bf16 %v210
    %v355 = vunpack.c.l.bf16 %v211
    %v356 = vunpack.c.h.bf16 %v211
    %v357 = vunpack.c.l.bf16 %v212
    %v358 = vunpack.c.h.bf16 %v212
    %v359 = vunpack.c.l.bf16 %v213
    %v360 = vunpack.c.l.bf16 %v214
    %v361 = vunpack.c.h.bf16 %v214
    %v362 = vunpack.c.l.bf16 %v215
    %v363 = vunpack.c.h.bf16 %v215
    %v364 = vunpack.c.l.bf16 %v216
    %v365 = vunpack.c.h.bf16 %v216
    %v366 = vunpack.c.l.bf16 %v217
    %v367 = vunpack.c.l.bf16 %v218
    %v368 = vunpack.c.h.bf16 %v218
    %v369 = vunpack.c.l.bf16 %v219
    %v370 = vunpack.c.h.bf16 %v219
    %v371 = vunpack.c.l.bf16 %v220
    %v372 = vunpack.c.h.bf16 %v220
    %v373 = vunpack.c.l.bf16 %v221
    %v374 = vunpack.c.l.bf16 %v222
    %v375 = vunpack.c.h.bf16 %v222
    %v376 = vunpack.c.l.bf16 %v223
    %v377 = vunpack.c.h.bf16 %v223
    %v378 = vunpack.c.l.bf16 %v224
    %v379 = vunpack.c.h.bf16 %v224
    %v380 = vunpack.c.l.bf16 %v225
    %v381 = vunpack.c.l.bf16 %v226
    %v382 = vunpack.c.h.bf16 %v226
    %v383 = vunpack.c.l.bf16 %v227
    %v384 = vunpack.c.h.bf16 %v227
    %v385 = vunpack.c.l.bf16 %v228
    %v386 = vunpack.c.h.bf16 %v228
    %v387 = vunpack.c.l.bf16 %v229
    %v388 = vunpack.c.l.bf16 %v230
    %v389 = vunpack.c.h.bf16 %v230
    %v390 = vunpack.c.l.bf16 %v231
    %v391 = vunpack.c.h.bf16 %v231
    %v392 = vunpack.c.l.bf16 %v232
    %v393 = vunpack.c.h.bf16 %v232
    %v394 = vunpack.c.l.bf16 %v233
    %v395 = vunpack.c.l.bf16 %v234
    %v396 = vunpack.c.h.bf16 %v234
    %v397 = vunpack.c.l.bf16 %v235
    %v398 = vunpack.c.h.bf16 %v235
    %v399 = vunpack.c.l.bf16 %v236
    %v400 = vunpack.c.h.bf16 %v236
    %v401 = vunpack.c.l.bf16 %v237
    %v402 = vunpack.c.l.bf16 %v238
    %v403 = vunpack.c.h.bf16 %v238
    %v404 = vunpack.c.l.bf16 %v239
    %v405 = vunpack.c.h.bf16 %v239
    %v406 = vunpack.c.l.bf16 %v240
    %v407 = vunpack.c.h.bf16 %v240
    %v408 = vunpack.c.l.bf16 %v241
    %v409 = vunpack.c.l.bf16 %v242
    %v410 = vunpack.c.h.bf16 %v242
    %v411 = vunpack.c.l.bf16 %v243
    %v412 = vunpack.c.h.bf16 %v243
    %v413 = vunpack.c.l.bf16 %v244
    %v414 = vunpack.c.h.bf16 %v244
    %v415 = vunpack.c.l.bf16 %v245
    %v416 = vunpack.c.l.bf16 %v246
    %v417 = vunpack.c.h.bf16 %v246
    %v418 = vunpack.c.l.bf16 %v247
    %v419 = vunpack.c.h.bf16 %v247
    %v420 = vunpack.c.l.bf16 %v248
    %v421 = vunpack.c.h.bf16 %v248
    %v422 = vunpack.c.l.bf16 %v249
    %v423 = vunpack.c.l.bf16 %v250
    %v424 = vunpack.c.h.bf16 %v250
    %v425 = vunpack.c.l.bf16 %v251
    %v426 = vunpack.c.h.bf16 %v251
    %v427 = vunpack.c.l.bf16 %v252
    %v428 = vunpack.c.h.bf16 %v252
    %v429 = vunpack.c.l.bf16 %v253
    %v430 = vunpack.c.l.bf16 %v254
    %v431 = vunpack.c.h.bf16 %v254
    %v432 = vunpack.c.l.bf16 %v255
    %v433 = vunpack.c.h.bf16 %v255
    %v434 = vunpack.c.l.bf16 %v256
    %v435 = vunpack.c.h.bf16 %v256
    %v436 = vunpack.c.l.bf16 %v257
    %v437 = vunpack.c.l.bf16 %v258
    %v438 = vunpack.c.h.bf16 %v258
    %v439 = vunpack.c.l.bf16 %v259
    %v440 = vunpack.c.h.bf16 %v259
    %v441 = vunpack.c.l.bf16 %v260
    %v442 = vunpack.c.h.bf16 %v260
    %v443 = vunpack.c.l.bf16 %v261
    %v444 = vunpack.c.l.bf16 %v262
    %v445 = vunpack.c.h.bf16 %v262
    %v446 = vunpack.c.l.bf16 %v263
    %v447 = vunpack.c.h.bf16 %v263
    %v448 = vunpack.c.l.bf16 %v264
    %v449 = vunpack.c.h.bf16 %v264
    %v450 = vunpack.c.l.bf16 %v265
    %v451 = vunpack.c.l.bf16 %v266
    %v452 = vunpack.c.h.bf16 %v266
    %v453 = vunpack.c.l.bf16 %v267
    %v454 = vunpack.c.h.bf16 %v267
    %v455 = vunpack.c.l.bf16 %v268
    %v456 = vunpack.c.h.bf16 %v268
    %v457 = vunpack.c.l.bf16 %v269
    %v458 = vunpack.c.l.bf16 %v270
    %v459 = vunpack.c.h.bf16 %v270
    %v460 = vunpack.c.l.bf16 %v271
    %v461 = vunpack.c.h.bf16 %v271
    %v462 = vunpack.c.l.bf16 %v272
    %v463 = vunpack.c.h.bf16 %v272
    %v464 = vunpack.c.l.bf16 %v273
    %v465 = vunpack.c.l.bf16 %v274
    %v466 = vunpack.c.h.bf16 %v274
    %v467 = vunpack.c.l.bf16 %v275
    %v468 = vunpack.c.h.bf16 %v275
    %v469 = vunpack.c.l.bf16 %v276
    %v470 = vunpack.c.h.bf16 %v276
    %v471 = vunpack.c.l.bf16 %v277
    %v472 = vunpack.c.l.bf16 %v278
    %v473 = vunpack.c.h.bf16 %v278
    %v474 = vunpack.c.l.bf16 %v279
    %v475 = vunpack.c.h.bf16 %v279
    %v476 = vunpack.c.l.bf16 %v280
    %v477 = vunpack.c.h.bf16 %v280
    %v478 = vunpack.c.l.bf16 %v281
    %v479 = vunpack.c.l.bf16 %v282
    %v480 = vunpack.c.h.bf16 %v282
    %v481 = vunpack.c.l.bf16 %v283
    %v482 = vunpack.c.h.bf16 %v283
    %v483 = vunpack.c.l.bf16 %v284
    %v484 = vunpack.c.h.bf16 %v284
    %v485 = vunpack.c.l.bf16 %v285
    %v486 = vunpack.c.l.bf16 %v286
    %v487 = vunpack.c.h.bf16 %v286
    %v488 = vunpack.c.l.bf16 %v287
    %v489 = vunpack.c.h.bf16 %v287
    %v490 = vunpack.c.l.bf16 %v288
    %v491 = vunpack.c.h.bf16 %v288
    %v492 = vunpack.c.l.bf16 %v289
    %v493 = vunpack.c.l.bf16 %v290
    %v494 = vunpack.c.h.bf16 %v290
    %v495 = vunpack.c.l.bf16 %v291
    %v496 = vunpack.c.h.bf16 %v291
    %v497 = vunpack.c.l.bf16 %v292
    %v498 = vunpack.c.h.bf16 %v292
    %v499 = vunpack.c.l.bf16 %v293
    %v500 = vunpack.c.l.bf16 %v294
    %v501 = vunpack.c.h.bf16 %v294
    %v502 = vunpack.c.l.bf16 %v295
    %v503 = vunpack.c.h.bf16 %v295
    %v504 = vunpack.c.l.bf16 %v296
    %v505 = vunpack.c.h.bf16 %v296
    %v506 = vunpack.c.l.bf16 %v297
    %v507 = vunpack.c.l.bf16 %v298
    %v508 = vunpack.c.h.bf16 %v298
    %v509 = vunpack.c.l.bf16 %v299
    %v510 = vunpack.c.h.bf16 %v299
    %v511 = vunpack.c.l.bf16 %v300
    %v512 = vunpack.c.h.bf16 %v300
    %v513 = vunpack.c.l.bf16 %v301
    %v514 = vunpack.c.l.bf16 %v302
    %v515 = vunpack.c.h.bf16 %v302
    %v516 = vunpack.c.l.bf16 %v303
    %v517 = vunpack.c.h.bf16 %v303
    %v518 = vunpack.c.l.bf16 %v304
    %v519 = vunpack.c.h.bf16 %v304
    %v520 = vunpack.c.l.bf16 %v305
    %v521 = vunpack.c.l.bf16 %v306
    %v522 = vunpack.c.h.bf16 %v306
    %v523 = vunpack.c.l.bf16 %v307
    %v524 = vunpack.c.h.bf16 %v307
    %v525 = vunpack.c.l.bf16 %v308
    %v526 = vunpack.c.h.bf16 %v308
    %v527 = vunpack.c.l.bf16 %v309
    %v528 = vunpack.c.l.bf16 %v310
    %v529 = vunpack.c.h.bf16 %v310
    %v530 = vunpack.c.l.bf16 %v311
    %v531 = vunpack.c.h.bf16 %v311
    %v532 = vunpack.c.l.bf16 %v312
    %v533 = vunpack.c.h.bf16 %v312
    %v534 = vunpack.c.l.bf16 %v313
    %v535 = vunpack.c.l.bf16 %v314
    %v536 = vunpack.c.h.bf16 %v314
    %v537 = vunpack.c.l.bf16 %v315
    %v538 = vunpack.c.h.bf16 %v315
    %v539 = vunpack.c.l.bf16 %v316
    %v540 = vunpack.c.h.bf16 %v316
    %v541 = vunpack.c.l.bf16 %v317
    %v542 = vld [vmem:[%s4] sm:$0xff]
    %v544 = vlaneseq
    %v545 = vshrl.u32 %v544, 7
    %v546 = vsub.s32 0, %v545
    %v547 = vrot.slane %v542, %v546
    %v548 = vlaneseq
    %v549 = vshrl.u32 %v548, 7
    %v550 = vsub.s32 1, %v549
    %v551 = vrot.slane %v542, %v550
    %v552 = vlaneseq
    %v553 = vshrl.u32 %v552, 7
    %v554 = vsub.s32 2, %v553
    %v555 = vrot.slane %v542, %v554
    %v556 = vlaneseq
    %v557 = vshrl.u32 %v556, 7
    %v558 = vsub.s32 3, %v557
    %v559 = vrot.slane %v542, %v558
    %v560 = vlaneseq
    %v561 = vshrl.u32 %v560, 7
    %v562 = vsub.s32 4, %v561
    %v563 = vrot.slane %v542, %v562
    %v564 = vlaneseq
    %v565 = vshrl.u32 %v564, 7
    %v566 = vsub.s32 5, %v565
    %v567 = vrot.slane %v542, %v566
    %v568 = vlaneseq
    %v569 = vshrl.u32 %v568, 7
    %v570 = vsub.s32 6, %v569
    %v571 = vrot.slane %v542, %v570
    %579 = vmatprep.subr.mxu0 %v424
    %580 = vmatpush1.msra.mxu0 %v423
    %581 = vmatprep.subr.mxu0 %v417
    %582 = vmatpush1.msra.mxu0 %v416
    %583 = vmatprep.subr.mxu0 %v410
    %584 = vmatpush1.msra.mxu0 %v409
    %585 = vmatprep.subr.mxu0 %v403
    %586 = vmatpush1.msra.mxu0 %v402
    %587 = vmatprep.subr.mxu0 %v396
    %588 = vmatpush1.msra.mxu0 %v395
    %589 = vmatprep.subr.mxu0 %v389
    %590 = vmatpush1.msra.mxu0 %v388
    %591 = vmatprep.subr.mxu0 %v382
    %592 = vmatpush1.msra.mxu0 %v381
    %593 = vmatprep.subr.mxu0 %v375
    %594 = vmatpush1.msra.mxu0 %v374
    %595 = vmatprep.subr.mxu0 %v368
    %596 = vmatpush1.msra.mxu0 %v367
    %597 = vmatprep.subr.mxu0 %v361
    %598 = vmatpush1.msra.mxu0 %v360
    %599 = vmatprep.subr.mxu0 %v354
    %600 = vmatpush1.msra.mxu0 %v353
    %601 = vmatprep.subr.mxu0 %v347
    %602 = vmatpush1.msra.mxu0 %v346
    %603 = vmatprep.subr.mxu0 %v340
    %604 = vmatpush1.msra.mxu0 %v339
    %605 = vmatprep.subr.mxu0 %v333
    %606 = vmatpush1.msra.mxu0 %v332
    %607 = vmatprep.subr.mxu0 %v326
    %608 = vmatpush1.msra.mxu0 %v325
    %609 = vmatprep.subr.mxu0 %v319
    %610 = vmatpush1.msra.mxu0 %v318
    %611 = vmatprep.subr.mxu0 %v536
    %612 = vmatpush2.msra.mxu0 %v535
    %613 = vmatprep.subr.mxu0 %v529
    %614 = vmatpush2.msra.mxu0 %v528
    %615 = vmatprep.subr.mxu0 %v522
    %616 = vmatpush2.msra.mxu0 %v521
    %617 = vmatprep.subr.mxu0 %v515
    %618 = vmatpush2.msra.mxu0 %v514
    %619 = vmatprep.subr.mxu0 %v508
    %620 = vmatpush2.msra.mxu0 %v507
    %621 = vmatprep.subr.mxu0 %v501
    %622 = vmatpush2.msra.mxu0 %v500
    %623 = vmatprep.subr.mxu0 %v494
    %624 = vmatpush2.msra.mxu0 %v493
    %625 = vmatprep.subr.mxu0 %v487
    %626 = vmatpush2.msra.mxu0 %v486
    %627 = vmatprep.subr.mxu0 %v480
    %628 = vmatpush2.msra.mxu0 %v479
    %629 = vmatprep.subr.mxu0 %v473
    %630 = vmatpush2.msra.mxu0 %v472
    %631 = vmatprep.subr.mxu0 %v466
    %632 = vmatpush2.msra.mxu0 %v465
    %633 = vmatprep.subr.mxu0 %v459
    %634 = vmatpush2.msra.mxu0 %v458
    %635 = vmatprep.subr.mxu0 %v452
    %636 = vmatpush2.msra.mxu0 %v451
    %637 = vmatprep.subr.mxu0 %v445
    %638 = vmatpush2.msra.mxu0 %v444
    %639 = vmatprep.subr.mxu0 %v438
    %640 = vmatpush2.msra.mxu0 %v437
    %641 = vmatprep.subr.mxu0 %v431
    %642 = vmatpush2.msra.mxu0 %v430
    %643 = vmatprep.mubr.f32.mxu0 %v189
    %644 = vmatmul.mubr.f32.gmra.mxu0 %v188
    %v645 = vpop.f32.mrf.mxu0
    %v646 = vadd.f32 %v547, %v645
    %v647 = vpop.f32.mrf.mxu0
    %v648 = vadd.f32 %v551, %v647
    %649 = vdwg.mxu0
    %650 = vmatprep.subr.mxu0 %v426
    %651 = vmatpush1.msra.mxu0 %v425
    %652 = vmatprep.subr.mxu0 %v419
    %653 = vmatpush1.msra.mxu0 %v418
    %654 = vmatprep.subr.mxu0 %v412
    %655 = vmatpush1.msra.mxu0 %v411
    %656 = vmatprep.subr.mxu0 %v405
    %657 = vmatpush1.msra.mxu0 %v404
    %658 = vmatprep.subr.mxu0 %v398
    %659 = vmatpush1.msra.mxu0 %v397
    %660 = vmatprep.subr.mxu0 %v391
    %661 = vmatpush1.msra.mxu0 %v390
    %662 = vmatprep.subr.mxu0 %v384
    %663 = vmatpush1.msra.mxu0 %v383
    %664 = vmatprep.subr.mxu0 %v377
    %665 = vmatpush1.msra.mxu0 %v376
    %666 = vmatprep.subr.mxu0 %v370
    %667 = vmatpush1.msra.mxu0 %v369
    %668 = vmatprep.subr.mxu0 %v363
    %669 = vmatpush1.msra.mxu0 %v362
    %670 = vmatprep.subr.mxu0 %v356
    %671 = vmatpush1.msra.mxu0 %v355
    %672 = vmatprep.subr.mxu0 %v349
    %673 = vmatpush1.msra.mxu0 %v348
    %674 = vmatprep.subr.mxu0 %v342
    %675 = vmatpush1.msra.mxu0 %v341
    %676 = vmatprep.subr.mxu0 %v335
    %677 = vmatpush1.msra.mxu0 %v334
    %678 = vmatprep.subr.mxu0 %v328
    %679 = vmatpush1.msra.mxu0 %v327
    %680 = vmatprep.subr.mxu0 %v321
    %681 = vmatpush1.msra.mxu0 %v320
    %682 = vmatprep.subr.mxu0 %v538
    %683 = vmatpush2.msra.mxu0 %v537
    %684 = vmatprep.subr.mxu0 %v531
    %685 = vmatpush2.msra.mxu0 %v530
    %686 = vmatprep.subr.mxu0 %v524
    %687 = vmatpush2.msra.mxu0 %v523
    %688 = vmatprep.subr.mxu0 %v517
    %689 = vmatpush2.msra.mxu0 %v516
    %690 = vmatprep.subr.mxu0 %v510
    %691 = vmatpush2.msra.mxu0 %v509
    %692 = vmatprep.subr.mxu0 %v503
    %693 = vmatpush2.msra.mxu0 %v502
    %694 = vmatprep.subr.mxu0 %v496
    %695 = vmatpush2.msra.mxu0 %v495
    %696 = vmatprep.subr.mxu0 %v489
    %697 = vmatpush2.msra.mxu0 %v488
    %698 = vmatprep.subr.mxu0 %v482
    %699 = vmatpush2.msra.mxu0 %v481
    %700 = vmatprep.subr.mxu0 %v475
    %701 = vmatpush2.msra.mxu0 %v474
    %702 = vmatprep.subr.mxu0 %v468
    %703 = vmatpush2.msra.mxu0 %v467
    %704 = vmatprep.subr.mxu0 %v461
    %705 = vmatpush2.msra.mxu0 %v460
    %706 = vmatprep.subr.mxu0 %v454
    %707 = vmatpush2.msra.mxu0 %v453
    %708 = vmatprep.subr.mxu0 %v447
    %709 = vmatpush2.msra.mxu0 %v446
    %710 = vmatprep.subr.mxu0 %v440
    %711 = vmatpush2.msra.mxu0 %v439
    %712 = vmatprep.subr.mxu0 %v433
    %713 = vmatpush2.msra.mxu0 %v432
    %714 = vmatprep.mubr.f32.mxu0 %v189
    %715 = vmatmul.mubr.f32.gmra.mxu0 %v188
    %v716 = vpop.f32.mrf.mxu0
    %v717 = vadd.f32 %v555, %v716
    %v718 = vpop.f32.mrf.mxu0
    %v719 = vadd.f32 %v559, %v718
    %720 = vdwg.mxu0
    %721 = vmatprep.subr.mxu0 %v428
    %722 = vmatpush1.msra.mxu0 %v427
    %723 = vmatprep.subr.mxu0 %v421
    %724 = vmatpush1.msra.mxu0 %v420
    %725 = vmatprep.subr.mxu0 %v414
    %726 = vmatpush1.msra.mxu0 %v413
    %727 = vmatprep.subr.mxu0 %v407
    %728 = vmatpush1.msra.mxu0 %v406
    %729 = vmatprep.subr.mxu0 %v400
    %730 = vmatpush1.msra.mxu0 %v399
    %731 = vmatprep.subr.mxu0 %v393
    %732 = vmatpush1.msra.mxu0 %v392
    %733 = vmatprep.subr.mxu0 %v386
    %734 = vmatpush1.msra.mxu0 %v385
    %735 = vmatprep.subr.mxu0 %v379
    %736 = vmatpush1.msra.mxu0 %v378
    %737 = vmatprep.subr.mxu0 %v372
    %738 = vmatpush1.msra.mxu0 %v371
    %739 = vmatprep.subr.mxu0 %v365
    %740 = vmatpush1.msra.mxu0 %v364
    %741 = vmatprep.subr.mxu0 %v358
    %742 = vmatpush1.msra.mxu0 %v357
    %743 = vmatprep.subr.mxu0 %v351
    %744 = vmatpush1.msra.mxu0 %v350
    %745 = vmatprep.subr.mxu0 %v344
    %746 = vmatpush1.msra.mxu0 %v343
    %747 = vmatprep.subr.mxu0 %v337
    %748 = vmatpush1.msra.mxu0 %v336
    %749 = vmatprep.subr.mxu0 %v330
    %750 = vmatpush1.msra.mxu0 %v329
    %751 = vmatprep.subr.mxu0 %v323
    %752 = vmatpush1.msra.mxu0 %v322
    %753 = vmatprep.subr.mxu0 %v540
    %754 = vmatpush2.msra.mxu0 %v539
    %755 = vmatprep.subr.mxu0 %v533
    %756 = vmatpush2.msra.mxu0 %v532
    %757 = vmatprep.subr.mxu0 %v526
    %758 = vmatpush2.msra.mxu0 %v525
    %759 = vmatprep.subr.mxu0 %v519
    %760 = vmatpush2.msra.mxu0 %v518
    %761 = vmatprep.subr.mxu0 %v512
    %762 = vmatpush2.msra.mxu0 %v511
    %763 = vmatprep.subr.mxu0 %v505
    %764 = vmatpush2.msra.mxu0 %v504
    %765 = vmatprep.subr.mxu0 %v498
    %766 = vmatpush2.msra.mxu0 %v497
    %767 = vmatprep.subr.mxu0 %v491
    %768 = vmatpush2.msra.mxu0 %v490
    %769 = vmatprep.subr.mxu0 %v484
    %770 = vmatpush2.msra.mxu0 %v483
    %771 = vmatprep.subr.mxu0 %v477
    %772 = vmatpush2.msra.mxu0 %v476
    %773 = vmatprep.subr.mxu0 %v470
    %774 = vmatpush2.msra.mxu0 %v469
    %775 = vmatprep.subr.mxu0 %v463
    %776 = vmatpush2.msra.mxu0 %v462
    %777 = vmatprep.subr.mxu0 %v456
    %778 = vmatpush2.msra.mxu0 %v455
    %779 = vmatprep.subr.mxu0 %v449
    %780 = vmatpush2.msra.mxu0 %v448
    %781 = vmatprep.subr.mxu0 %v442
    %782 = vmatpush2.msra.mxu0 %v441
    %783 = vmatprep.subr.mxu0 %v435
    %784 = vmatpush2.msra.mxu0 %v434
    %785 = vmatprep.mubr.f32.mxu0 %v189
    %786 = vmatmul.mubr.f32.gmra.mxu0 %v188
    %v787 = vpop.f32.mrf.mxu0
    %v788 = vadd.f32 %v563, %v787
    %v789 = vpop.f32.mrf.mxu0
    %v790 = vadd.f32 %v567, %v789
    %791 = vdwg.mxu0
    %792 = vmatprep.subr.mxu0 0.0
    %793 = vmatpush1.msra.mxu0 %v429
    %794 = vmatprep.subr.mxu0 0.0
    %795 = vmatpush1.msra.mxu0 %v422
    %796 = vmatprep.subr.mxu0 0.0
    %797 = vmatpush1.msra.mxu0 %v415
    %798 = vmatprep.subr.mxu0 0.0
    %799 = vmatpush1.msra.mxu0 %v408
    %800 = vmatprep.subr.mxu0 0.0
    %801 = vmatpush1.msra.mxu0 %v401
    %802 = vmatprep.subr.mxu0 0.0
    %803 = vmatpush1.msra.mxu0 %v394
    %804 = vmatprep.subr.mxu0 0.0
    %805 = vmatpush1.msra.mxu0 %v387
    %806 = vmatprep.subr.mxu0 0.0
    %807 = vmatpush1.msra.mxu0 %v380
    %808 = vmatprep.subr.mxu0 0.0
    %809 = vmatpush1.msra.mxu0 %v373
    %810 = vmatprep.subr.mxu0 0.0
    %811 = vmatpush1.msra.mxu0 %v366
    %812 = vmatprep.subr.mxu0 0.0
    %813 = vmatpush1.msra.mxu0 %v359
    %814 = vmatprep.subr.mxu0 0.0
    %815 = vmatpush1.msra.mxu0 %v352
    %816 = vmatprep.subr.mxu0 0.0
    %817 = vmatpush1.msra.mxu0 %v345
    %818 = vmatprep.subr.mxu0 0.0
    %819 = vmatpush1.msra.mxu0 %v338
    %820 = vmatprep.subr.mxu0 0.0
    %821 = vmatpush1.msra.mxu0 %v331
    %822 = vmatprep.subr.mxu0 0.0
    %823 = vmatpush1.msra.mxu0 %v324
    %824 = vmatprep.subr.mxu0 0.0
    %825 = vmatpush2.msra.mxu0 %v541
    %826 = vmatprep.subr.mxu0 0.0
    %827 = vmatpush2.msra.mxu0 %v534
    %828 = vmatprep.subr.mxu0 0.0
    %829 = vmatpush2.msra.mxu0 %v527
    %830 = vmatprep.subr.mxu0 0.0
    %831 = vmatpush2.msra.mxu0 %v520
    %832 = vmatprep.subr.mxu0 0.0
    %833 = vmatpush2.msra.mxu0 %v513
    %834 = vmatprep.subr.mxu0 0.0
    %835 = vmatpush2.msra.mxu0 %v506
    %836 = vmatprep.subr.mxu0 0.0
    %837 = vmatpush2.msra.mxu0 %v499
    %838 = vmatprep.subr.mxu0 0.0
    %839 = vmatpush2.msra.mxu0 %v492
    %840 = vmatprep.subr.mxu0 0.0
    %841 = vmatpush2.msra.mxu0 %v485
    %842 = vmatprep.subr.mxu0 0.0
    %843 = vmatpush2.msra.mxu0 %v478
    %844 = vmatprep.subr.mxu0 0.0
    %845 = vmatpush2.msra.mxu0 %v471
    %846 = vmatprep.subr.mxu0 0.0
    %847 = vmatpush2.msra.mxu0 %v464
    %848 = vmatprep.subr.mxu0 0.0
    %849 = vmatpush2.msra.mxu0 %v457
    %850 = vmatprep.subr.mxu0 0.0
    %851 = vmatpush2.msra.mxu0 %v450
    %852 = vmatprep.subr.mxu0 0.0
    %853 = vmatpush2.msra.mxu0 %v443
    %854 = vmatprep.subr.mxu0 0.0
    %855 = vmatpush2.msra.mxu0 %v436
    %856 = vmatprep.mubr.f32.mxu0 %v189
    %857 = vmatmul.mubr.f32.gmra.mxu0 %v188
    %v858 = vpop.f32.mrf.mxu0
    %v859 = vadd.f32 %v571, %v858
    %v860 = vpop.f32.mrf.mxu0
    %861 = vdwg.mxu0
    %v862 = vtanh.pop %v646
    %v863 = vtanh.pop %v648
    %v864 = vtanh.pop %v717
    %v865 = vtanh.pop %v719
    %v866 = vtanh.pop %v788
    %v867 = vtanh.pop %v790
    %v868 = vtanh.pop %v859
    %869 = vst [vmem:[#allocation10] sm:$0xff] %v862
    %870 = vst [vmem:[#allocation10 + $0x8] sm:$0xff] %v863
    %871 = vst [vmem:[#allocation10 + $0x10] sm:$0xff] %v864
    %872 = vst [vmem:[#allocation10 + $0x18] sm:$0xff] %v865
    %873 = vst [vmem:[#allocation10 + $0x20] sm:$0xff] %v866
    %874 = vst [vmem:[#allocation10 + $0x28] sm:$0xff] %v867
    %875 = vst [vmem:[#allocation10 + $0x30] sm:$0xff] %v868
    // Predicated region
    $region38: #{tpu_custom_call.1} parent=1 // pred_check
      _
    $region39: #{tpu_custom_call.1} parent=1 // pred_check_branch
      %877 = sbr.rel (0) target = $region41
    $region40: #{tpu_custom_call.1} parent=1 // pred_region
      %s879 = ssub.s32 896, 896
      %880 = vsyncadd [#allocation4], %s879
      %s882 = sshll.u32 [#allocation10], 4
      %s883 = int_to_ptr.vmem [resolvable:$true] %s882
      %885 = dma.vmem_to_hbm [thread:$0]  %s883, 896, %s5, [#allocation4]
    $region41: #{tpu_custom_call.1} parent=1 // pred_fallthru
      _
    // Predicated region
    $region42: #{tpu_custom_call.1} parent=1 // pred_check
      _
    $region43: #{tpu_custom_call.1} parent=1 // pred_check_branch
      %887 = sbr.rel (0) target = $region45
    $region44: #{tpu_custom_call.1} parent=1 // pred_region
      %888 = dma.done [#allocation4], 896
    $region45: #{tpu_custom_call.1} parent=1 // pred_fallthru
      _
    %889 = vsyncpa [#allocation3], 1
    %890 = vsyncpa [#allocation6], 1
    %891 = vsyncpa [#allocation9], 1
    %892 = vsyncpa [#allocation4], 1

</llo_original>
